<compile_context>
chip_gen: v5e
topology: v5e:2x2
jax: 0.10.0
libtpu: 0.0.40
codegen_flags: <defaults>
</compile_context>

<pallas_src>
import jax
import jax.numpy as jnp
from jax.experimental import pallas as pl
from jax.experimental.pallas import tpu as pltpu


def _mlp_kernel(x_ref, w1_ref, b1_ref, w2_ref, b2_ref, w3_ref, b3_ref, o_ref):
    # In-kernel f32 -> bf16 cast of the streamed x tile (VPU, no slot pressure).
    xb = x_ref[...].astype(jnp.bfloat16)
    # Layer 1: [TB,F](bf16) @ [F,32](bf16) -> f32 acc; bias + ReLU in f32.
    h1 = jnp.dot(xb, w1_ref[...], preferred_element_type=jnp.float32)
    h1 = jnp.maximum(h1 + b1_ref[...], 0.0)
    # Layer 2: [TB,32](bf16) @ [32,16](bf16) -> f32 acc; bias + ReLU in f32.
    h2 = jnp.dot(h1.astype(w2_ref.dtype), w2_ref[...],
                 preferred_element_type=jnp.float32)
    h2 = jnp.maximum(h2 + b2_ref[...], 0.0)
    # Layer 3 (1-wide output): contract the 16 features of w3 (1,16) with the
    # last dim of h2 (TB,16) so the result is (1, TB) -- batch on lanes ->
    # lane-dense, unmasked stores. f32 throughout.
    h3 = jax.lax.dot_general(
        w3_ref[...], h2,
        dimension_numbers=(((1,), (1,)), ((), ())),
        preferred_element_type=jnp.float32) + b3_ref[...]
    # Dropout (eval mode) = identity, then sigmoid (EUP).
    o_ref[0] = jax.nn.sigmoid(h3)


# Cap that keeps the lane-padded, double-buffered f32 x tile (~tile_b*512 B per
# buffer at F=8) plus intermediates comfortably under v7x's 64 MiB VMEM.
_MAX_TILE_B = 32768


def _choose_tile_b(batch, tile_b):
    tile_b = int(min(int(tile_b), _MAX_TILE_B))
    tile_b = max(8, (tile_b // 8) * 8)             # f32 sublane multiple
    tile_b = min(tile_b, pl.cdiv(batch, 8) * 8)    # don't exceed (rounded) batch
    # Keep >= 2 grid steps when possible so both v7x TensorCores get work.
    if pl.cdiv(batch, tile_b) < 2 and batch > 8:
        tile_b = max(8, pl.cdiv(pl.cdiv(batch, 2), 8) * 8)
    return tile_b


def diabetes_nn_forward(x, params, tile_b=_MAX_TILE_B):
    """x: [B, F] float32; params: dict of w1,b1,w2,b2,w3,b3. Returns [B, 1] f32."""
    B, F = x.shape
    w1, b1 = params["w1"], params["b1"]
    w2, b2 = params["w2"], params["b2"]
    w3, b3 = params["w3"], params["b3"]

    tile_b = _choose_tile_b(B, tile_b)
    num_tiles = pl.cdiv(B, tile_b)

    # VMEM budget: lane-padded x tile + lane-dense out tile (double-buffered)
    # plus in-kernel intermediates (h1/h2/bf16 copies, generous). Only raise
    # the scoped limit when the defaults would not fit; cap for v7x (64 MiB).
    x_buf = tile_b * (pl.cdiv(F, 128) * 128) * 4
    out_buf = 8 * tile_b * 4
    interm = tile_b * (32 + 16 + 16 + 32) * 4
    need = 2 * (x_buf + out_buf) + interm + (2 << 20)
    vmem_limit = None if need <= (16 << 20) else int(min(max(need, 32 << 20),
                                                         56 << 20))

    resident = lambda a: pl.BlockSpec(a.shape, lambda i: (0, 0))

    flops = 2 * B * (F * 32 + 32 * 16 + 16)
    bytes_accessed = (
        B * F * 4                                       # x (f32, streamed)
        + (w1.size + w2.size) * 2                       # bf16 weights (resident)
        + (b1.size + b2.size + w3.size + b3.size) * 4   # f32 weights/biases
        + num_tiles * tile_b * 4)                       # output (f32)

    out = pl.pallas_call(
        _mlp_kernel,
        out_shape=jax.ShapeDtypeStruct((num_tiles, 1, tile_b), jnp.float32),
        grid=(num_tiles,),
        in_specs=[
            pl.BlockSpec((tile_b, F), lambda i: (i, 0)),   # x: streamed per tile
            resident(w1), resident(b1),
            resident(w2), resident(b2),
            resident(w3), resident(b3),
        ],
        out_specs=pl.BlockSpec((1, 1, tile_b), lambda i: (i, 0, 0)),
        compiler_params=pltpu.CompilerParams(
            dimension_semantics=("parallel",),
            vmem_limit_bytes=vmem_limit),
        cost_estimate=pl.CostEstimate(
            flops=flops, transcendentals=B, bytes_accessed=bytes_accessed),
    )(x, w1, b1, w2, b2, w3, b3)

    # (num_tiles, 1, tile_b) row-major == batch order; drop ragged-tail rows.
    return out.reshape(num_tiles * tile_b, 1)[:B]


def init_params(features, key):
    """PyTorch nn.Linear-style U(-1/sqrt(fan_in), .) init.

    w1/w2 are stored transposed to (in, out) and in bf16 (MXU input dtype,
    documented precision choice); w3 is kept in fc3.weight layout (1, 16) f32.
    """
    ks = jax.random.split(key, 6)

    def linear(kw, kb, fan_in, fan_out):
        bound = 1.0 / (fan_in ** 0.5)
        w = jax.random.uniform(kw, (fan_in, fan_out), jnp.float32, -bound, bound)
        b = jax.random.uniform(kb, (1, fan_out), jnp.float32, -bound, bound)
        return w, b

    w1, b1 = linear(ks[0], ks[1], features, 32)
    w2, b2 = linear(ks[2], ks[3], 32, 16)
    w3, b3 = linear(ks[4], ks[5], 16, 1)
    return {
        "w1": w1.astype(jnp.bfloat16), "b1": b1,
        "w2": w2.astype(jnp.bfloat16), "b2": b2,
        "w3": w3.T, "b3": b3,                       # (1,16) / (1,1), f32
    }


def _reference(x, p):
    """Same math as the kernel (bf16 MXU inputs, f32 accumulation) in plain JAX."""
    h1 = jnp.maximum(
        jnp.dot(x.astype(jnp.bfloat16), p["w1"],
                preferred_element_type=jnp.float32) + p["b1"], 0.0)
    h2 = jnp.maximum(
        jnp.dot(h1.astype(jnp.bfloat16), p["w2"],
                preferred_element_type=jnp.float32) + p["b2"], 0.0)
    h3 = h2 @ p["w3"].T + p["b3"]
    return jax.nn.sigmoid(h3)


def _reference_f32(x, p):
    """Full-f32 reference (PyTorch-semantics sanity check)."""
    h1 = jnp.maximum(x @ p["w1"].astype(jnp.float32) + p["b1"], 0.0)
    h2 = jnp.maximum(h1 @ p["w2"].astype(jnp.float32) + p["b2"], 0.0)
    return jax.nn.sigmoid(h2 @ p["w3"].T + p["b3"])


if __name__ == "__main__":
    key = jax.random.PRNGKey(0)
    k_x, k_p = jax.random.split(key)

    B, FEATURES = 20, 8  # small diabetes-like tabular batch
    x = jax.random.normal(k_x, (B, FEATURES), dtype=jnp.float32)
    params = init_params(FEATURES, k_p)

    # Default path: tile chosen automatically (2 grid steps, ragged last block).
    out = jax.block_until_ready(diabetes_nn_forward(x, params))
    assert out.shape == (B, 1), out.shape

    ref = _reference(x, params)
    assert jnp.allclose(out, ref, atol=1e-3, rtol=1e-3), (
        f"max err vs matched ref {jnp.max(jnp.abs(out - ref))}")

    ref32 = _reference_f32(x, params)
    assert jnp.allclose(out, ref32, atol=2e-2, rtol=2e-2), (
        f"max err vs f32 ref {jnp.max(jnp.abs(out - ref32))}")

    # Small explicit tile: 3-step grid with a ragged final block.
    out2 = jax.block_until_ready(diabetes_nn_forward(x, params, tile_b=8))
    assert jnp.allclose(out2, ref, atol=1e-3, rtol=1e-3), (
        f"max err (tile_b=8) {jnp.max(jnp.abs(out2 - ref))}")

    print("KERNEL_OK")
</pallas_src>

<mosaic_0001>
module attributes {stable_mosaic.version = 11 : i64} {
  func.func @_mlp_kernel(%arg0: i32, %arg1: memref<16x8xf32, #tpu.memory_space<vmem>>, %arg2: memref<8x32xbf16, #tpu.memory_space<vmem>>, %arg3: memref<1x32xf32, #tpu.memory_space<vmem>>, %arg4: memref<32x16xbf16, #tpu.memory_space<vmem>>, %arg5: memref<1x16xf32, #tpu.memory_space<vmem>>, %arg6: memref<1x16xf32, #tpu.memory_space<vmem>>, %arg7: memref<1x1xf32, #tpu.memory_space<vmem>>, %arg8: memref<1x1x16xf32, #tpu.memory_space<vmem>>) attributes {dimension_semantics = [#tpu.dimension_semantics<parallel>], iteration_bounds = array<i64: 2>, scalar_prefetch = 0 : i64, scratch_operands = 0 : i64, tpu.core_type = #tpu.core_type<tc>, window_params = [{transform_indices = @transform_0, window_bounds = array<i64: 16, 8>}, {pipeline_mode = #tpu.pipeline_mode<synchronous>, transform_indices = @transform_1, window_bounds = array<i64: 8, 32>}, {pipeline_mode = #tpu.pipeline_mode<synchronous>, transform_indices = @transform_2, window_bounds = array<i64: 1, 32>}, {pipeline_mode = #tpu.pipeline_mode<synchronous>, transform_indices = @transform_3, window_bounds = array<i64: 32, 16>}, {pipeline_mode = #tpu.pipeline_mode<synchronous>, transform_indices = @transform_4, window_bounds = array<i64: 1, 16>}, {pipeline_mode = #tpu.pipeline_mode<synchronous>, transform_indices = @transform_5, window_bounds = array<i64: 1, 16>}, {pipeline_mode = #tpu.pipeline_mode<synchronous>, transform_indices = @transform_6, window_bounds = array<i64: 1, 1>}, {transform_indices = @transform_7, window_bounds = array<i64: 1, 1, 16>}]} {
    %c0 = arith.constant 0 : index
    %c0_0 = arith.constant 0 : index
    %0 = vector.load %arg1[%c0, %c0_0] : memref<16x8xf32, #tpu.memory_space<vmem>>, vector<16x8xf32>
    %1 = arith.truncf %0 : vector<16x8xf32> to vector<16x8xbf16>
    %c0_1 = arith.constant 0 : index
    %c0_2 = arith.constant 0 : index
    %2 = vector.load %arg2[%c0_1, %c0_2] : memref<8x32xbf16, #tpu.memory_space<vmem>>, vector<8x32xbf16>
    %cst = arith.constant dense<0.000000e+00> : vector<16x32xf32>
    %3 = tpu.matmul %1, %2, %cst {dimension_numbers = #tpu.dot_dimension_numbers<[1], [0], [0], [1], [0, 0, 1, 1], [], []>} : vector<16x8xbf16>, vector<8x32xbf16>, vector<16x32xf32> -> vector<16x32xf32>
    %c0_3 = arith.constant 0 : index
    %c0_4 = arith.constant 0 : index
    %4 = vector.load %arg3[%c0_3, %c0_4] : memref<1x32xf32, #tpu.memory_space<vmem>>, vector<1x32xf32>
    %5 = vector.broadcast %4 : vector<1x32xf32> to vector<16x32xf32>
    %6 = arith.addf %3, %5 : vector<16x32xf32>
    %cst_5 = arith.constant 0.000000e+00 : f32
    %7 = vector.broadcast %cst_5 : f32 to vector<16x32xf32>
    %8 = arith.maximumf %6, %7 : vector<16x32xf32>
    %9 = arith.truncf %8 : vector<16x32xf32> to vector<16x32xbf16>
    %c0_6 = arith.constant 0 : index
    %c0_7 = arith.constant 0 : index
    %10 = vector.load %arg4[%c0_6, %c0_7] : memref<32x16xbf16, #tpu.memory_space<vmem>>, vector<32x16xbf16>
    %cst_8 = arith.constant dense<0.000000e+00> : vector<16x16xf32>
    %11 = tpu.matmul %9, %10, %cst_8 {dimension_numbers = #tpu.dot_dimension_numbers<[1], [0], [0], [1], [0, 0, 1, 1], [], []>} : vector<16x32xbf16>, vector<32x16xbf16>, vector<16x16xf32> -> vector<16x16xf32>
    %c0_9 = arith.constant 0 : index
    %c0_10 = arith.constant 0 : index
    %12 = vector.load %arg5[%c0_9, %c0_10] : memref<1x16xf32, #tpu.memory_space<vmem>>, vector<1x16xf32>
    %13 = vector.broadcast %12 : vector<1x16xf32> to vector<16x16xf32>
    %14 = arith.addf %11, %13 : vector<16x16xf32>
    %cst_11 = arith.constant 0.000000e+00 : f32
    %15 = vector.broadcast %cst_11 : f32 to vector<16x16xf32>
    %16 = arith.maximumf %14, %15 : vector<16x16xf32>
    %c0_12 = arith.constant 0 : index
    %c0_13 = arith.constant 0 : index
    %17 = vector.load %arg6[%c0_12, %c0_13] : memref<1x16xf32, #tpu.memory_space<vmem>>, vector<1x16xf32>
    %cst_14 = arith.constant dense<0.000000e+00> : vector<1x16xf32>
    %18 = tpu.matmul %17, %16, %cst_14 {dimension_numbers = #tpu.dot_dimension_numbers<[1], [1], [0], [0], [0, 0, 1, 0], [], []>} : vector<1x16xf32>, vector<16x16xf32>, vector<1x16xf32> -> vector<1x16xf32>
    %c0_15 = arith.constant 0 : index
    %c0_16 = arith.constant 0 : index
    %19 = vector.load %arg7[%c0_15, %c0_16] : memref<1x1xf32, #tpu.memory_space<vmem>>, vector<1x1xf32>
    %20 = vector.broadcast %19 : vector<1x1xf32> to vector<1x16xf32>
    %21 = arith.addf %18, %20 : vector<1x16xf32>
    %22 = arith.negf %21 : vector<1x16xf32>
    %23 = math.exp %22 : vector<1x16xf32>
    %cst_17 = arith.constant 1.000000e+00 : f32
    %24 = vector.broadcast %cst_17 : f32 to vector<1x16xf32>
    %25 = arith.addf %24, %23 : vector<1x16xf32>
    %26 = arith.divf %24, %25 : vector<1x16xf32>
    %c0_18 = arith.constant 0 : index
    %c0_19 = arith.constant 0 : index
    %c0_20 = arith.constant 0 : index
    %27 = vector.load %arg8[%c0_18, %c0_19, %c0_20] : memref<1x1x16xf32, #tpu.memory_space<vmem>>, vector<1x1x16xf32>
    %28 = vector.shape_cast %27 : vector<1x1x16xf32> to vector<1x16xf32>
    %29 = vector.shape_cast %26 : vector<1x16xf32> to vector<1x1x16xf32>
    tpu.vector_store %arg8[%c0_18, %c0_19, %c0_20], %29 {strides = array<i32>} : memref<1x1x16xf32, #tpu.memory_space<vmem>>, vector<1x1x16xf32>,
    return
  }
  func.func @transform_0(%arg0: i32) -> (i32, i32) {
    %c0_i32 = arith.constant 0 : i32
    %c0_i32_0 = arith.constant 0 : i32
    return %arg0, %c0_i32 : i32, i32
  }
  func.func @transform_1(%arg0: i32) -> (i32, i32) {
    %c0_i32 = arith.constant 0 : i32
    %c0_i32_0 = arith.constant 0 : i32
    %c0_i32_1 = arith.constant 0 : i32
    return %c0_i32, %c0_i32_0 : i32, i32
  }
  func.func @transform_2(%arg0: i32) -> (i32, i32) {
    %c0_i32 = arith.constant 0 : i32
    %c0_i32_0 = arith.constant 0 : i32
    %c0_i32_1 = arith.constant 0 : i32
    return %c0_i32, %c0_i32_0 : i32, i32
  }
  func.func @transform_3(%arg0: i32) -> (i32, i32) {
    %c0_i32 = arith.constant 0 : i32
    %c0_i32_0 = arith.constant 0 : i32
    %c0_i32_1 = arith.constant 0 : i32
    return %c0_i32, %c0_i32_0 : i32, i32
  }
  func.func @transform_4(%arg0: i32) -> (i32, i32) {
    %c0_i32 = arith.constant 0 : i32
    %c0_i32_0 = arith.constant 0 : i32
    %c0_i32_1 = arith.constant 0 : i32
    return %c0_i32, %c0_i32_0 : i32, i32
  }
  func.func @transform_5(%arg0: i32) -> (i32, i32) {
    %c0_i32 = arith.constant 0 : i32
    %c0_i32_0 = arith.constant 0 : i32
    %c0_i32_1 = arith.constant 0 : i32
    return %c0_i32, %c0_i32_0 : i32, i32
  }
  func.func @transform_6(%arg0: i32) -> (i32, i32) {
    %c0_i32 = arith.constant 0 : i32
    %c0_i32_0 = arith.constant 0 : i32
    %c0_i32_1 = arith.constant 0 : i32
    return %c0_i32, %c0_i32_0 : i32, i32
  }
  func.func @transform_7(%arg0: i32) -> (i32, i32, i32) {
    %c0_i32 = arith.constant 0 : i32
    %c0_i32_0 = arith.constant 0 : i32
    %c0_i32_1 = arith.constant 0 : i32
    return %arg0, %c0_i32, %c0_i32_0 : i32, i32, i32
  }
}

</mosaic_0001>

<llo_original>
// kernel: tpu_custom_call.1
$region0: #{tpu_custom_call.1}
  #allocation0 [shape = 'u32[]', space=smem, size = 0x4, offset = 0x4, fixed_abs, tag = 'smem constant byte address 0x4 - core index']
  #allocation1 [shape = 'u32[72,128]{1,0:T(1,128)}', space=vmem, size = 0x9000, scoped, tag = 'internal scratch']
  #allocation2 [shape = 'f32[1,1]{1,0:T(1,128)S(1)}', space=vmem, size = 0x200, scoped, tag = 'scoped memory for tpu_custom_call.1']
  %s0 = inlined_call_operand.vmem [shape: f32[20,8], index: 0, kind: input, shape index: {}]
  %s1 = inlined_call_operand.vmem [shape: bf16[8,32], index: 1, kind: input, shape index: {}]
  %s2 = inlined_call_operand.vmem [shape: f32[1,32], index: 2, kind: input, shape index: {}]
  %s3 = inlined_call_operand.vmem [shape: bf16[32,16], index: 3, kind: input, shape index: {}]
  %s4 = inlined_call_operand.vmem [shape: f32[1,16], index: 4, kind: input, shape index: {}]
  %s5 = inlined_call_operand.vmem [shape: f32[1,16], index: 5, kind: input, shape index: {}]
  %s6 = inlined_call_operand.<no memory space> [shape: f32[1,1], index: 6, kind: input, shape index: {}]
  %s7 = inlined_call_operand.hbm [shape: f32[2,1,16], index: 7, kind: output, shape index: {}]
  %s8 = sld [smem:[#allocation0]]
  $region61: #{tpu_custom_call.1} parent=0
    _
  %s10 = ssub.s32 1, %s8
  %s11 = scalar_select 0, %s10, %s8
  %v12 = vstv %s6
  %13 = vst [vmem:[#allocation2] sm:$0x1] %v12
  $region1: #{tpu_custom_call.1} parent=0
    #allocation3 [shape = 'u8[1024]{0}', space=vmem, size = 0x400, scoped, tag = 'output window, operand 0']
    #allocation4 [shape = 's32[2]{0}', space=sflag, size = 0x8, scoped, tag = 'scoped memory for tpu_custom_call.1']
    %14 = vsyncpa [#allocation4], 0
    %s15 = scalar_lea.sflag [#allocation4], 1
    %16 = vsyncpa %s15, 0
    loop: start=0, step=1, limit=4
    $region2: #{tpu_custom_call.1} parent=1 // loop_pre_header
      _
    $region3: #{tpu_custom_call.1} parent=1 // loop_header
      %s18 = sphi 0, %s22
      %p19 = scmp.ge.s32.totalorder %s18, 4
      %s28 = sphi 0, %s30
      %s31 = sphi 0, %s28
      %s32 = sphi 0, %s31
      %s48 = sphi 0, %s32
      %s52 = sphi 0, %s52
      %s54 = sphi 0, %s52
      %s55 = sphi 0, %s54
      %s69 = sphi 0, %s55
      %s73 = sphi 0, %s73
      %s75 = sphi 0, %s73
      %s76 = sphi 0, %s75
      %s90 = sphi 0, %s76
      %s94 = sphi 0, %s94
      %s96 = sphi 0, %s94
      %s97 = sphi 0, %s96
      %s111 = sphi 0, %s97
      %s115 = sphi 0, %s115
      %s117 = sphi 0, %s115
      %s118 = sphi 0, %s117
      %s132 = sphi 0, %s118
      %s136 = sphi 0, %s136
      %s138 = sphi 0, %s136
      %s139 = sphi 0, %s138
      %s153 = sphi 0, %s139
      %s157 = sphi 0, %s157
      %s159 = sphi 0, %s157
      %s160 = sphi 0, %s159
      %s174 = sphi 0, %s160
      %s180 = sphi 0, %s182
      %s183 = sphi 0, %s180
      %s184 = sphi 0, %s183
      %s200 = sphi 0, %s184
    $region4: #{tpu_custom_call.1} parent=1 // loop_header_branch
      %21 = sbr.rel (%p19) target = $region8
    $region5: #{tpu_custom_call.1} parent=1 // loop_body
      %s23 = ssub.s32 %s18, 1
      %s24 = ssub.s32 %s18, 2
      %s25 = sadd.s32 %s18, 1
      %s26 = ssub.s32 %s18, %s25
      %p27 = scmp.eq.s32.totalorder %s26, 0
      %s29 = sadd.s32 %s28, 1
      %s30 = scalar_select %p27, %s28, %s29
      %p33 = pneg %p27
      %p34 = scmp.eq.s32.totalorder %s18, 1
      %p35 = por %p33, %p34
      %p36 = scmp.ne.s32.totalorder %s28, %s31
      %p37 = scmp.eq.s32.totalorder %s18, 0
      %p38 = por %p36, %p37
      %p39 = scmp.ne.s32.totalorder %s28, %s31
      %p40 = scmp.eq.s32.totalorder %s23, 1
      %p41 = por %p39, %p40
      %p42 = scmp.ne.s32.totalorder %s31, %s32
      %p43 = scmp.eq.s32.totalorder %s23, 0
      %p44 = por %p42, %p43
      %p45 = scmp.ne.s32.totalorder %s31, %s32
      %p46 = scmp.eq.s32.totalorder %s24, 1
      %p47 = por %p45, %p46
      %p49 = scmp.ne.s32.totalorder %s32, %s48
      %p50 = scmp.eq.s32.totalorder %s24, 0
      %p51 = por %p49, %p50
      %s53 = sadd.s32 %s52, 1
      %p56 = scmp.eq.s32.totalorder %s18, 1
      %p57 = scmp.ne.s32.totalorder %s52, %s54
      %p58 = scmp.eq.s32.totalorder %s18, 0
      %p59 = por %p57, %p58
      %p60 = scmp.ne.s32.totalorder %s52, %s54
      %p61 = scmp.eq.s32.totalorder %s23, 1
      %p62 = por %p60, %p61
      %p63 = scmp.ne.s32.totalorder %s54, %s55
      %p64 = scmp.eq.s32.totalorder %s23, 0
      %p65 = por %p63, %p64
      %p66 = scmp.ne.s32.totalorder %s54, %s55
      %p67 = scmp.eq.s32.totalorder %s24, 1
      %p68 = por %p66, %p67
      %p70 = scmp.ne.s32.totalorder %s55, %s69
      %p71 = scmp.eq.s32.totalorder %s24, 0
      %p72 = por %p70, %p71
      %s74 = sadd.s32 %s73, 1
      %p77 = scmp.eq.s32.totalorder %s18, 1
      %p78 = scmp.ne.s32.totalorder %s73, %s75
      %p79 = scmp.eq.s32.totalorder %s18, 0
      %p80 = por %p78, %p79
      %p81 = scmp.ne.s32.totalorder %s73, %s75
      %p82 = scmp.eq.s32.totalorder %s23, 1
      %p83 = por %p81, %p82
      %p84 = scmp.ne.s32.totalorder %s75, %s76
      %p85 = scmp.eq.s32.totalorder %s23, 0
      %p86 = por %p84, %p85
      %p87 = scmp.ne.s32.totalorder %s75, %s76
      %p88 = scmp.eq.s32.totalorder %s24, 1
      %p89 = por %p87, %p88
      %p91 = scmp.ne.s32.totalorder %s76, %s90
      %p92 = scmp.eq.s32.totalorder %s24, 0
      %p93 = por %p91, %p92
      %s95 = sadd.s32 %s94, 1
      %p98 = scmp.eq.s32.totalorder %s18, 1
      %p99 = scmp.ne.s32.totalorder %s94, %s96
      %p100 = scmp.eq.s32.totalorder %s18, 0
      %p101 = por %p99, %p100
      %p102 = scmp.ne.s32.totalorder %s94, %s96
      %p103 = scmp.eq.s32.totalorder %s23, 1
      %p104 = por %p102, %p103
      %p105 = scmp.ne.s32.totalorder %s96, %s97
      %p106 = scmp.eq.s32.totalorder %s23, 0
      %p107 = por %p105, %p106
      %p108 = scmp.ne.s32.totalorder %s96, %s97
      %p109 = scmp.eq.s32.totalorder %s24, 1
      %p110 = por %p108, %p109
      %p112 = scmp.ne.s32.totalorder %s97, %s111
      %p113 = scmp.eq.s32.totalorder %s24, 0
      %p114 = por %p112, %p113
      %s116 = sadd.s32 %s115, 1
      %p119 = scmp.eq.s32.totalorder %s18, 1
      %p120 = scmp.ne.s32.totalorder %s115, %s117
      %p121 = scmp.eq.s32.totalorder %s18, 0
      %p122 = por %p120, %p121
      %p123 = scmp.ne.s32.totalorder %s115, %s117
      %p124 = scmp.eq.s32.totalorder %s23, 1
      %p125 = por %p123, %p124
      %p126 = scmp.ne.s32.totalorder %s117, %s118
      %p127 = scmp.eq.s32.totalorder %s23, 0
      %p128 = por %p126, %p127
      %p129 = scmp.ne.s32.totalorder %s117, %s118
      %p130 = scmp.eq.s32.totalorder %s24, 1
      %p131 = por %p129, %p130
      %p133 = scmp.ne.s32.totalorder %s118, %s132
      %p134 = scmp.eq.s32.totalorder %s24, 0
      %p135 = por %p133, %p134
      %s137 = sadd.s32 %s136, 1
      %p140 = scmp.eq.s32.totalorder %s18, 1
      %p141 = scmp.ne.s32.totalorder %s136, %s138
      %p142 = scmp.eq.s32.totalorder %s18, 0
      %p143 = por %p141, %p142
      %p144 = scmp.ne.s32.totalorder %s136, %s138
      %p145 = scmp.eq.s32.totalorder %s23, 1
      %p146 = por %p144, %p145
      %p147 = scmp.ne.s32.totalorder %s138, %s139
      %p148 = scmp.eq.s32.totalorder %s23, 0
      %p149 = por %p147, %p148
      %p150 = scmp.ne.s32.totalorder %s138, %s139
      %p151 = scmp.eq.s32.totalorder %s24, 1
      %p152 = por %p150, %p151
      %p154 = scmp.ne.s32.totalorder %s139, %s153
      %p155 = scmp.eq.s32.totalorder %s24, 0
      %p156 = por %p154, %p155
      %s158 = sadd.s32 %s157, 1
      %p161 = scmp.eq.s32.totalorder %s18, 1
      %p162 = scmp.ne.s32.totalorder %s157, %s159
      %p163 = scmp.eq.s32.totalorder %s18, 0
      %p164 = por %p162, %p163
      %p165 = scmp.ne.s32.totalorder %s157, %s159
      %p166 = scmp.eq.s32.totalorder %s23, 1
      %p167 = por %p165, %p166
      %p168 = scmp.ne.s32.totalorder %s159, %s160
      %p169 = scmp.eq.s32.totalorder %s23, 0
      %p170 = por %p168, %p169
      %p171 = scmp.ne.s32.totalorder %s159, %s160
      %p172 = scmp.eq.s32.totalorder %s24, 1
      %p173 = por %p171, %p172
      %p175 = scmp.ne.s32.totalorder %s160, %s174
      %p176 = scmp.eq.s32.totalorder %s24, 0
      %p177 = por %p175, %p176
      %s178 = ssub.s32 %s18, %s25
      %p179 = scmp.eq.s32.totalorder %s178, 0
      %s181 = sadd.s32 %s180, 1
      %s182 = scalar_select %p179, %s180, %s181
      %p185 = pneg %p179
      %p186 = scmp.eq.s32.totalorder %s18, 1
      %p187 = por %p185, %p186
      %p188 = scmp.ne.s32.totalorder %s180, %s183
      %p189 = scmp.eq.s32.totalorder %s18, 0
      %p190 = por %p188, %p189
      %p191 = scmp.ne.s32.totalorder %s180, %s183
      %p192 = scmp.eq.s32.totalorder %s23, 1
      %p193 = por %p191, %p192
      %p194 = scmp.ne.s32.totalorder %s183, %s184
      %p195 = scmp.eq.s32.totalorder %s23, 0
      %p196 = por %p194, %p195
      %p197 = scmp.ne.s32.totalorder %s183, %s184
      %p198 = scmp.eq.s32.totalorder %s24, 1
      %p199 = por %p197, %p198
      %p201 = scmp.ne.s32.totalorder %s184, %s200
      %p202 = scmp.eq.s32.totalorder %s24, 0
      %p203 = por %p201, %p202
      %p204 = scmp.le.s32.totalorder 1, %s18
      %p205 = scmp.lt.s32.totalorder %s18, 3
      %p206 = pnand %p204, %p205
      %p207 = pneg %p206
      // Predicated region
      $region9: #{tpu_custom_call.1} parent=5 // pred_check
        _
      $region10: #{tpu_custom_call.1} parent=5 // pred_check_branch
        %209 = sbr.rel (%p206) target = $region12
      $region11: #{tpu_custom_call.1} parent=5 // pred_region
        %s210 = ssub.s32 %s18, 1
        // Predicated region
        $region13: #{tpu_custom_call.1} parent=11 // pred_check
          %p211 = pneg %p65
        $region14: #{tpu_custom_call.1} parent=11 // pred_check_branch
          %213 = sbr.rel (%p211) target = $region16
        $region15: #{tpu_custom_call.1} parent=11 // pred_region
          _
        $region16: #{tpu_custom_call.1} parent=11 // pred_fallthru
          _
        // Predicated region
        $region17: #{tpu_custom_call.1} parent=11 // pred_check
          %p214 = pneg %p86
        $region18: #{tpu_custom_call.1} parent=11 // pred_check_branch
          %216 = sbr.rel (%p214) target = $region20
        $region19: #{tpu_custom_call.1} parent=11 // pred_region
          _
        $region20: #{tpu_custom_call.1} parent=11 // pred_fallthru
          _
        // Predicated region
        $region21: #{tpu_custom_call.1} parent=11 // pred_check
          %p217 = pneg %p107
        $region22: #{tpu_custom_call.1} parent=11 // pred_check_branch
          %219 = sbr.rel (%p217) target = $region24
        $region23: #{tpu_custom_call.1} parent=11 // pred_region
          _
        $region24: #{tpu_custom_call.1} parent=11 // pred_fallthru
          _
        // Predicated region
        $region25: #{tpu_custom_call.1} parent=11 // pred_check
          %p220 = pneg %p128
        $region26: #{tpu_custom_call.1} parent=11 // pred_check_branch
          %222 = sbr.rel (%p220) target = $region28
        $region27: #{tpu_custom_call.1} parent=11 // pred_region
          _
        $region28: #{tpu_custom_call.1} parent=11 // pred_fallthru
          _
        // Predicated region
        $region29: #{tpu_custom_call.1} parent=11 // pred_check
          %p223 = pneg %p149
        $region30: #{tpu_custom_call.1} parent=11 // pred_check_branch
          %225 = sbr.rel (%p223) target = $region32
        $region31: #{tpu_custom_call.1} parent=11 // pred_region
          _
        $region32: #{tpu_custom_call.1} parent=11 // pred_fallthru
          _
        // Predicated region
        $region33: #{tpu_custom_call.1} parent=11 // pred_check
          %p226 = pneg %p170
        $region34: #{tpu_custom_call.1} parent=11 // pred_check_branch
          %228 = sbr.rel (%p226) target = $region36
        $region35: #{tpu_custom_call.1} parent=11 // pred_region
          _
        $region36: #{tpu_custom_call.1} parent=11 // pred_fallthru
          _
      $region12: #{tpu_custom_call.1} parent=5 // pred_fallthru
        _
      %p229 = scmp.lt.s32.totalorder %s18, 2
      // Predicated region
      $region37: #{tpu_custom_call.1} parent=5 // pred_check
        %p230 = pneg %p229
      $region38: #{tpu_custom_call.1} parent=5 // pred_check_branch
        %232 = sbr.rel (%p230) target = $region40
      $region39: #{tpu_custom_call.1} parent=5 // pred_region
        // Predicated region
        $region41: #{tpu_custom_call.1} parent=39 // pred_check
          %p233 = pneg %p38
        $region42: #{tpu_custom_call.1} parent=39 // pred_check_branch
          %235 = sbr.rel (%p233) target = $region44
        $region43: #{tpu_custom_call.1} parent=39 // pred_region
          %s236 = smul.u32 2, %s18
          %s237 = ssub.s32 3, %s236
          %p238 = scmp.lt.s32.totalorder %s237, 2
          %s239 = scalar_select %p238, %s237, 2
          %s240 = smul.u32 8, %s239
          %p241 = scmp.lt.s32.totalorder %s236, 2
          %s242 = scalar_select %p241, %s236, 2
          %s243 = smul.addr %s242, 8
          %s244 = scalar_lea.vmem %s0, %s243
          %s245 = smul.u32 2, %s18
          %s246 = ssub.s32 3, %s245
          %p247 = scmp.lt.s32.totalorder %s246, 2
          %s248 = scalar_select %p247, %s246, 2
          %s249 = smul.u32 8, %s248
        $region44: #{tpu_custom_call.1} parent=39 // pred_fallthru
          _
      $region40: #{tpu_custom_call.1} parent=5 // pred_fallthru
        _
      %p250 = scmp.le.s32.totalorder 1, %s18
      %p251 = scmp.lt.s32.totalorder %s18, 3
      %p252 = pnand %p250, %p251
      %p253 = pneg %p252
      // Predicated region
      $region45: #{tpu_custom_call.1} parent=5 // pred_check
        _
      $region46: #{tpu_custom_call.1} parent=5 // pred_check_branch
        %255 = sbr.rel (%p252) target = $region48
      $region47: #{tpu_custom_call.1} parent=5 // pred_region
        %s256 = ssub.s32 %s18, 1
        %s257 = smul.u32 2, %s23
        %s258 = ssub.s32 3, %s257
        %p259 = scmp.lt.s32.totalorder %s258, 2
        %s260 = scalar_select %p259, %s258, 2
        %s261 = smul.u32 8, %s260
        %p262 = scmp.lt.s32.totalorder %s257, 2
        %s263 = scalar_select %p262, %s257, 2
        %s264 = smul.addr %s263, 8
        %s265 = scalar_lea.vmem %s0, %s264
        %p266 = pneg %p44
        %p267 = pneg %p41
        %p268 = pneg %p65
        %p269 = pneg %p62
        %p270 = pneg %p86
        %p271 = pneg %p83
        %p272 = pneg %p107
        %p273 = pneg %p104
        %p274 = pneg %p128
        %p275 = pneg %p125
        %p276 = pneg %p149
        %p277 = pneg %p146
        %p278 = pneg %p170
        %p279 = pneg %p167
        %p280 = pneg %p196
        %p281 = pneg %p193
        %s282 = sand.u32 %s183, 1
        %s283 = scalar_lea.sflag [#allocation4], %s282
        %s284 = sand.u32 %s183, 1
        %s285 = scalar_lea.vmem [#allocation3], %s284
        %s286 = smul.u32 2, %s23
        %s287 = ssub.s32 3, %s286
        %p288 = scmp.lt.s32.totalorder %s287, 2
        %s289 = scalar_select %p288, %s287, 2
        %s290 = smul.u32 8, %s289
        %p291 = scmp.lt.s32.totalorder %s286, 2
        %s292 = scalar_select %p291, %s286, 2
        %s293 = smul.addr %s292, 8
        %s294 = scalar_lea.vmem %s0, %s293
        %s295 = smul.u32 2, %s23
        %s296 = ssub.s32 3, %s295
        %p297 = scmp.lt.s32.totalorder %s296, 2
        %s298 = scalar_select %p297, %s296, 2
        %s299 = smul.u32 8, %s298
        %v301 = vld [vmem:[%s294] sm:$0xff]
        %v302 = vld [vmem:[%s294 + $0x8] sm:$0xff]
        %v303 = vpack.c.bf16 %v302, %v301
        %v304 = vld [vmem:[%s1] sm:$0xf]
        %v305 = vld [vmem:[%s2] sm:$0x1]
        %v307 = vperm.slane %v305, 0
        %vm309 = vcmask 64512
        %v311 = vsel %vm309, %v303, 0
        %vm313 = vcmask 1043456
        %v315 = vsel %vm313, %v304, 0
        %317 = vmatpush.bf16.msra.mxu0 0
        %318 = vmatpush.bf16.msra.mxu0 0
        %319 = vmatpush.bf16.msra.mxu0 0
        %320 = vmatpush.bf16.msra.mxu0 0
        %321 = vmatpush.bf16.msra.mxu0 0
        %322 = vmatpush.bf16.msra.mxu0 0
        %323 = vmatpush.bf16.msra.mxu0 0
        %324 = vmatpush.bf16.msra.mxu0 %v315
        %325 = vmatmul.bf16.gmra.mxu0 %v311
        %v326 = vpop.f32.mrf.mxu0
        %v327 = vadd.f32 %v307, %v326
        %v328 = vpop.f32.mrf.mxu0
        %v329 = vadd.f32 %v307, %v328
        %330 = vdwg.mxu0
        %v331 = vmax.f32 %v327, 0.0
        %v332 = vmax.f32 %v329, 0.0
        %v333 = vpack.c.bf16 %v332, %v331
        %v334 = vld [vmem:[%s3] sm:$0xf]
        %v335 = vld [vmem:[%s3 + $0x4] sm:$0xf]
        %v336 = vld [vmem:[%s3 + $0x8] sm:$0xf]
        %v337 = vld [vmem:[%s3 + $0xc] sm:$0xf]
        %v338 = vld [vmem:[%s4] sm:$0x1]
        %v340 = vperm.slane %v338, 0
        %v346 = vunpack.c.l.b16 %v334
        %v347 = vunpack.c.l.b16 %v335
        %v348 = vunpack.c.l.b16 %v336
        %v349 = vunpack.c.l.b16 %v337
        %v350 = vpack.c.b16 %v347, %v346
        %v351 = vpack.c.b16 %v349, %v348
        %vm354 = vcmask 261120
        %v356 = vsel %vm354, %v333, 0
        %358 = vmatpush.bf16.msra.mxu0 0
        %359 = vmatpush.bf16.msra.mxu0 0
        %360 = vmatpush.bf16.msra.mxu0 0
        %361 = vmatpush.bf16.msra.mxu0 0
        %362 = vmatpush.bf16.msra.mxu0 0
        %363 = vmatpush.bf16.msra.mxu0 0
        %364 = vmatpush.bf16.msra.mxu0 %v351
        %365 = vmatpush.bf16.msra.mxu0 %v350
        %366 = vmatmul.bf16.gmra.mxu0 %v356
        %v367 = vpop.f32.mrf.mxu0
        %v368 = vadd.f32 %v340, %v367
        %v369 = vpop.f32.mrf.mxu0
        %v370 = vadd.f32 %v340, %v369
        %371 = vdwg.mxu0
        %v372 = vmax.f32 %v368, 0.0
        %v373 = vmax.f32 %v370, 0.0
        %v374 = vld [vmem:[%s5] sm:$0x1]
        %v375 = vld [vmem:[#allocation2] sm:$0x1]
        %377 = vset.pattern.permute.xlu0 0
        %378 = vperm.xlu0 %377, %v375
        %v379 = vpop.permute.xlu0 %378
        %v381 = vperm.slane %v379, 0
        %vm382 = vcmask 130048
        %v384 = vsel %vm382, %v374, 0
        %v387 = vsel %vm382, %v372, 0
        %v390 = vsel %vm382, %v373, 0
        %392 = vmatpush.xpose.msra.mxu0 0.0
        %393 = vmatpush.xpose.msra.mxu0 0.0
        %394 = vmatpush.xpose.msra.mxu0 0.0
        %395 = vmatpush.xpose.msra.mxu0 0.0
        %396 = vmatpush.xpose.msra.mxu0 0.0
        %397 = vmatpush.xpose.msra.mxu0 0.0
        %398 = vmatpush.xpose.msra.mxu0 0.0
        %399 = vmatpush.xpose.msra.mxu0 0.0
        %400 = vmatpush.xpose.msra.mxu0 0.0
        %401 = vmatpush.xpose.msra.mxu0 0.0
        %402 = vmatpush.xpose.msra.mxu0 0.0
        %403 = vmatpush.xpose.msra.mxu0 0.0
        %404 = vmatpush.xpose.msra.mxu0 0.0
        %405 = vmatpush.xpose.msra.mxu0 0.0
        %406 = vmatpush.xpose.msra.mxu0 %v390
        %407 = vmatpush.xpose.msra.mxu0 %v387
        %408 = vmatmul.f32.gmra.mxu0 %v384
        %v409 = vpop.f32.mrf.mxu0
        %v410 = vadd.f32 %v381, %v409
        %411 = vdwg.mxu0
        %v412 = vxor.u32 %v410, 2147483648
        %v413 = vmul.f32 %v412, 1.442695
        %v414 = vpow.pop %v413
        %v415 = vadd.f32 %v414, 1.0
        %v416 = vrcp.pop %v415
        %v417 = vmul.f32 %v415, %v416
        %v418 = vsub.f32 1.0, %v417
        %v419 = vmul.f32 %v416, %v418
        %v420 = vadd.f32 %v416, %v419
        %vm421 = vweird.f32 %v415
        %vm422 = vweird.f32 %v416
        %vm423 = vmor %vm421, %vm422
        %v424 = vsel %vm423, %v416, %v420
        %v425 = vand.u32 2147483647, %v415
        %vm426 = vcmp.eq.f32.partialorder %v425, 8.507059e+37
        %v427 = vand.u32 %v415, 2147483648
        %v428 = vor.u32 1.1754944e-38, %v427
        %v429 = vsel %vm426, %v428, %v424
        %v430 = vmul.f32 1.0, %v429
        %vm431 = vcmask 122880
        %432 = vst.msk [vmem:[%s285] sm:$0x1] %vm431, %v430
        %s433 = sand.u32 %s183, 1
        %s434 = scalar_lea.sflag [#allocation4], %s433
        %s435 = sand.u32 %s183, 1
        %s436 = scalar_lea.vmem [#allocation3], %s435
        // Predicated region
        $region49: #{tpu_custom_call.1} parent=47 // pred_check
          %p437 = pneg %p193
        $region50: #{tpu_custom_call.1} parent=47 // pred_check_branch
          %439 = sbr.rel (%p437) target = $region52
        $region51: #{tpu_custom_call.1} parent=47 // pred_region
          %441 = vsyncadd %s434, 0
          %s442 = scalar_lea.hbm %s7, %s23
          %s444 = sshll.u32 %s436, 4
          %s445 = int_to_ptr.vmem [resolvable:$true] %s444
          %s446 = sshll.u32 %s442, 4
          %s447 = int_to_ptr.hbm [resolvable:$true] %s446
          %449 = dma.vmem_to_hbm [thread:$0]  %s445, 16, %s447, %s434
        $region52: #{tpu_custom_call.1} parent=47 // pred_fallthru
          _
      $region48: #{tpu_custom_call.1} parent=5 // pred_fallthru
        _
      %p450 = scmp.le.s32.totalorder 2, %s18
      // Predicated region
      $region53: #{tpu_custom_call.1} parent=5 // pred_check
        %p451 = pneg %p450
      $region54: #{tpu_custom_call.1} parent=5 // pred_check_branch
        %453 = sbr.rel (%p451) target = $region56
      $region55: #{tpu_custom_call.1} parent=5 // pred_region
        %s454 = ssub.s32 %s18, 2
        // Predicated region
        $region57: #{tpu_custom_call.1} parent=55 // pred_check
          %p455 = pneg %p199
        $region58: #{tpu_custom_call.1} parent=55 // pred_check_branch
          %457 = sbr.rel (%p455) target = $region60
        $region59: #{tpu_custom_call.1} parent=55 // pred_region
          %s458 = sand.u32 %s184, 1
          %s459 = scalar_lea.sflag [#allocation4], %s458
          %s460 = sand.u32 %s184, 1
          %s461 = scalar_lea.vmem [#allocation3], %s460
          %463 = dma.done %s459, 16
        $region60: #{tpu_custom_call.1} parent=55 // pred_fallthru
          _
      $region56: #{tpu_custom_call.1} parent=5 // pred_fallthru
        _
    $region6: #{tpu_custom_call.1} parent=1 // loop_footer
      %s22 = sadd.s32 1, %s18
    $region7: #{tpu_custom_call.1} parent=1 // loop_footer_branch
      %17 = sbr.rel target = $region3
    $region8: #{tpu_custom_call.1} parent=1 // loop_exit
      _
    %464 = vsyncpa [#allocation4], 1
    %s465 = scalar_lea.sflag [#allocation4], 1
    %466 = vsyncpa %s465, 1

</llo_original>
